<compile_context>
chip_gen: v7x
topology: tpu7x:2x2x1
jax: 0.10.0
libtpu: 0.0.40
codegen_flags: <defaults>
</compile_context>

<pallas_src>
import math

import jax
import jax.numpy as jnp
from jax.experimental import pallas as pl
from jax.experimental.pallas import tpu as pltpu


def _cdiv(a: int, b: int) -> int:
    return -(-a // b)


def _concat_kernel(x1_ref, x2_ref, o_ref):
    d1 = x1_ref.shape[-1]
    d2 = x2_ref.shape[-1]
    # Exactly one contiguous, lane-dense store per half.  Both halves start at
    # a 128-aligned lane offset because the wrapper gates on d1 % 128 == 0.
    o_ref[:, pl.ds(0, d1)] = x1_ref[...]
    o_ref[:, pl.ds(d1, d2)] = x2_ref[...]


def _sublane_multiple(dtype) -> int:
    # Sub-32-bit dtypes pack along sublanes: f32 -> 8, bf16 -> 16, int8 -> 32.
    itemsize = jnp.dtype(dtype).itemsize
    return max(8, 32 // itemsize)


def _physical_vmem_bytes() -> int:
    try:
        info = pltpu.get_tpu_info()
        cap = getattr(info, "vmem_capacity_bytes", None)
        if cap:
            return int(cap)
    except Exception:
        pass
    # Assume the smallest per-core VMEM (v7x, 64 MiB) if the query fails.
    return 64 << 20


def _pick_row_tile(rows: int, d_out: int, dtype):
    """Returns (tile_rows, vmem_limit_bytes).

    tile_rows is None when even the minimal sublane-multiple tile would blow
    the VMEM budget (caller should fall back to jnp.concatenate)."""
    itemsize = jnp.dtype(dtype).itemsize
    sub = _sublane_multiple(dtype)
    physical = _physical_vmem_bytes()

    # Budget for the DOUBLE-BUFFERED working set (x1 + x2 + out blocks, x2
    # buffers each).  min(physical/4, 32 MiB): 16 MiB on v7x (64 MiB VMEM),
    # 32 MiB on v5e/v6e (128 MiB VMEM) -- well under every generation's limit.
    budget_db = min(physical // 4, 32 << 20)
    vmem_limit = min(physical, budget_db + (8 << 20))  # + internal-scratch headroom

    bytes_per_row_db = 2 * 2 * d_out * itemsize  # (d1 + d2 + d_out) * 2 buffers
    tile_max = (budget_db // max(bytes_per_row_db, 1)) // sub * sub
    if tile_max < sub:
        # TODO(synk): add a 128-lane-multiple column grid axis for very wide
        # d_out instead of falling back.
        return None, vmem_limit

    if rows <= sub:
        # A block equal to the full dim is always layout-legal; single step.
        return rows, vmem_limit

    # Byte-driven tile size, balanced to an even tile count (>= 2) so v7x's two
    # TensorCores split the copy evenly.  At the budget, each step moves
    # budget_db / 2 (>= ~8 MiB) of HBM traffic, amortizing per-step overhead.
    n_tiles = _cdiv(rows, tile_max)
    n_tiles = max(2, n_tiles + (n_tiles % 2))
    tile = _cdiv(rows, n_tiles)
    tile = min(tile_max, _cdiv(tile, sub) * sub)
    tile = max(tile, sub)
    return tile, vmem_limit


def _concat_pallas_2d(x1, x2, tile_rows: int, vmem_limit_bytes: int):
    rows, d1 = x1.shape
    d2 = x2.shape[-1]
    d_out = d1 + d2
    grid = (_cdiv(rows, tile_rows),)
    return pl.pallas_call(
        _concat_kernel,
        out_shape=jax.ShapeDtypeStruct((rows, d_out), x1.dtype),
        grid_spec=pltpu.PrefetchScalarGridSpec(
            num_scalar_prefetch=0,
            grid=grid,
            in_specs=[
                pl.BlockSpec((tile_rows, d1), lambda i: (i, 0)),
                pl.BlockSpec((tile_rows, d2), lambda i: (i, 0)),
            ],
            out_specs=pl.BlockSpec((tile_rows, d_out), lambda i: (i, 0)),
        ),
        compiler_params=pltpu.CompilerParams(
            dimension_semantics=("parallel",),
            vmem_limit_bytes=vmem_limit_bytes,
        ),
    )(x1, x2)


def concat_cell_forward(x1, x2, *, force_pallas=False):
    """Pallas equivalent of th.cat([x1, x2], dim=-1).

    `force_pallas` only bypasses the minimum-size gate; alignment and VMEM-fit
    gates always apply (unaligned shapes are strictly faster via XLA's fused
    concatenate)."""
    assert x1.shape[:-1] == x2.shape[:-1], "leading dims must match"
    assert x1.dtype == x2.dtype, "dtypes must match"
    lead = x1.shape[:-1]
    d1, d2 = x1.shape[-1], x2.shape[-1]
    d_out = d1 + d2
    out_shape = lead + (d_out,)
    rows = math.prod(lead) if lead else 1

    itemsize = jnp.dtype(x1.dtype).itemsize
    out_bytes = rows * d_out * itemsize

    lane_aligned = d1 > 0 and d2 > 0 and d1 % 128 == 0 and d2 % 128 == 0
    big_enough = force_pallas or out_bytes >= (1 << 20)
    use_pallas = lane_aligned and big_enough and rows > 0

    tile_rows = None
    vmem_limit = 0
    if use_pallas:
        tile_rows, vmem_limit = _pick_row_tile(rows, d_out, x1.dtype)
        if tile_rows is None:
            use_pallas = False

    if not use_pallas:
        # Unaligned, tiny, degenerate, or too-wide: XLA's concatenate (which it
        # normally fuses into the consumer) is the right tool.
        return jnp.concatenate([x1, x2], axis=-1)

    x1_2d = x1.reshape(rows, d1)
    x2_2d = x2.reshape(rows, d2)
    out_2d = _concat_pallas_2d(x1_2d, x2_2d, tile_rows, vmem_limit)
    return out_2d.reshape(out_shape)


if __name__ == "__main__":
    key = jax.random.PRNGKey(0)
    k1, k2, k3, k4, k5, k6 = jax.random.split(key, 6)

    # 1) Spec-consistent small case: ConcatCell(input_dim=32) on (batch, seq, hidden).
    #    hidden=32 is not 128-lane-aligned, so this correctly takes the
    #    jnp.concatenate fallback (masked sub-128 stores would be slower).
    batch, seq, hidden = 2, 8, 32
    x1 = jax.random.normal(k1, (batch, seq, hidden), dtype=jnp.float32)
    x2 = jax.random.normal(k2, (batch, seq, hidden), dtype=jnp.float32)
    out = jax.block_until_ready(concat_cell_forward(x1, x2))
    ref = jnp.concatenate([x1, x2], axis=-1)
    assert out.shape == (batch, seq, 2 * hidden)
    assert jnp.array_equal(out, ref)

    # 2) 128-aligned case: exercises the Pallas kernel with a balanced 2-tile grid.
    y1 = jax.random.normal(k3, (2, 1024, 128), dtype=jnp.float32)
    y2 = jax.random.normal(k4, (2, 1024, 128), dtype=jnp.float32)
    out2 = jax.block_until_ready(concat_cell_forward(y1, y2))
    assert jnp.array_equal(out2, jnp.concatenate([y1, y2], axis=-1))

    # 3) 128-aligned, non-multiple row count: partial last block + bf16 sublane packing.
    z1 = jax.random.normal(k5, (3, 1000, 128), dtype=jnp.float32)
    z2 = jax.random.normal(k6, (3, 1000, 128), dtype=jnp.float32)
    out3 = jax.block_until_ready(concat_cell_forward(z1, z2))
    assert jnp.array_equal(out3, jnp.concatenate([z1, z2], axis=-1))

    w1 = z1[:, :256, :].astype(jnp.bfloat16)
    w2 = z2[:, :256, :].astype(jnp.bfloat16)
    out4 = jax.block_until_ready(concat_cell_forward(w1, w2, force_pallas=True))
    assert jnp.array_equal(out4, jnp.concatenate([w1, w2], axis=-1))

    print("KERNEL_OK")
</pallas_src>

<mosaic_0001>
module attributes {stable_mosaic.version = 11 : i64} {
  func.func @_concat_kernel(%arg0: i32, %arg1: memref<1024x128xf32, #tpu.memory_space<vmem>>, %arg2: memref<1024x128xf32, #tpu.memory_space<vmem>>, %arg3: memref<1024x256xf32, #tpu.memory_space<vmem>>) attributes {dimension_semantics = [#tpu.dimension_semantics<parallel>], iteration_bounds = array<i64: 2>, scalar_prefetch = 0 : i64, scratch_operands = 0 : i64, tpu.core_type = #tpu.core_type<tc>, window_params = [{transform_indices = @transform_0, window_bounds = array<i64: 1024, 128>}, {transform_indices = @transform_1, window_bounds = array<i64: 1024, 128>}, {transform_indices = @transform_2, window_bounds = array<i64: 1024, 256>}]} {
    %c0 = arith.constant 0 : index
    %c0_0 = arith.constant 0 : index
    %0 = vector.load %arg1[%c0, %c0_0] : memref<1024x128xf32, #tpu.memory_space<vmem>>, vector<1024x128xf32>
    %c0_1 = arith.constant 0 : index
    %c0_2 = arith.constant 0 : index
    %1 = vector.load %arg3[%c0_1, %c0_2] : memref<1024x256xf32, #tpu.memory_space<vmem>>, vector<1024x128xf32>
    tpu.vector_store %arg3[%c0_1, %c0_2], %0 {strides = array<i32>} : memref<1024x256xf32, #tpu.memory_space<vmem>>, vector<1024x128xf32>,
    %c0_3 = arith.constant 0 : index
    %c0_4 = arith.constant 0 : index
    %2 = vector.load %arg2[%c0_3, %c0_4] : memref<1024x128xf32, #tpu.memory_space<vmem>>, vector<1024x128xf32>
    %c0_5 = arith.constant 0 : index
    %c128 = arith.constant 128 : index
    %3 = vector.load %arg3[%c0_5, %c128] : memref<1024x256xf32, #tpu.memory_space<vmem>>, vector<1024x128xf32>
    tpu.vector_store %arg3[%c0_5, %c128], %2 {strides = array<i32>} : memref<1024x256xf32, #tpu.memory_space<vmem>>, vector<1024x128xf32>,
    return
  }
  func.func @transform_0(%arg0: i32) -> (i32, i32) {
    %c0_i32 = arith.constant 0 : i32
    %c0_i32_0 = arith.constant 0 : i32
    return %arg0, %c0_i32 : i32, i32
  }
  func.func @transform_1(%arg0: i32) -> (i32, i32) {
    %c0_i32 = arith.constant 0 : i32
    %c0_i32_0 = arith.constant 0 : i32
    return %arg0, %c0_i32 : i32, i32
  }
  func.func @transform_2(%arg0: i32) -> (i32, i32) {
    %c0_i32 = arith.constant 0 : i32
    %c0_i32_0 = arith.constant 0 : i32
    return %arg0, %c0_i32 : i32, i32
  }
}

</mosaic_0001>

<llo_original>
// kernel: tpu_custom_call.1
$region0: #{tpu_custom_call.1}
  #allocation0 [shape = 'u32[]', space=smem, size = 0x4, offset = 0x4, fixed_abs, tag = 'smem constant byte address 0x4 - core index']
  #allocation1 [shape = 'u32[144,128]{1,0:T(1,128)}', space=vmem, size = 0x12000, scoped, tag = 'internal scratch']
  %s0 = inlined_call_operand.hbm [shape: f32[2048,128], index: 0, kind: input, shape index: {}]
  %s1 = inlined_call_operand.hbm [shape: f32[2048,128], index: 1, kind: input, shape index: {}]
  %s2 = inlined_call_operand.hbm [shape: f32[2048,256], index: 2, kind: output, shape index: {}]
  %s3 = sld [smem:[#allocation0]]
  $region49: #{tpu_custom_call.1} parent=0
    _
  %s5 = ssub.s32 1, %s3
  %s6 = scalar_select 0, %s5, %s3
  $region1: #{tpu_custom_call.1} parent=0
    #allocation2 [shape = 'u8[1048576]{0}', space=vmem, size = 0x100000, scoped, tag = 'input window, operand 0']
    #allocation3 [shape = 's32[2]{0}', space=sflag, size = 0x8, scoped, tag = 'scoped memory for tpu_custom_call.1']
    #allocation4 [shape = 's32[2]{0}', space=sflag, size = 0x8, scoped, tag = 'scoped memory for tpu_custom_call.1']
    #allocation5 [shape = 'u8[1048576]{0}', space=vmem, size = 0x100000, scoped, tag = 'input window, operand 1']
    #allocation6 [shape = 's32[2]{0}', space=sflag, size = 0x8, scoped, tag = 'scoped memory for tpu_custom_call.1']
    #allocation7 [shape = 'u8[2097152]{0}', space=vmem, size = 0x200000, scoped, tag = 'output window, operand 0']
    %7 = vsyncpa [#allocation3], 0
    %s8 = scalar_lea.sflag [#allocation3], 1
    %9 = vsyncpa %s8, 0
    %10 = vsyncpa [#allocation6], 0
    %s11 = scalar_lea.sflag [#allocation6], 1
    %12 = vsyncpa %s11, 0
    %13 = vsyncpa [#allocation4], 0
    %s14 = scalar_lea.sflag [#allocation4], 1
    %15 = vsyncpa %s14, 0
    loop: start=0, step=1, limit=4
    $region2: #{tpu_custom_call.1} parent=1 // loop_pre_header
      _
    $region3: #{tpu_custom_call.1} parent=1 // loop_header
      %s17 = sphi 0, %s21
      %p18 = scmp.ge.s32.totalorder %s17, 4
      %s27 = sphi 0, %s29
      %s30 = sphi 0, %s27
      %s31 = sphi 0, %s30
      %s47 = sphi 0, %s31
      %s53 = sphi 0, %s55
      %s56 = sphi 0, %s53
      %s57 = sphi 0, %s56
      %s73 = sphi 0, %s57
      %s79 = sphi 0, %s81
      %s82 = sphi 0, %s79
      %s83 = sphi 0, %s82
      %s99 = sphi 0, %s83
    $region4: #{tpu_custom_call.1} parent=1 // loop_header_branch
      %20 = sbr.rel (%p18) target = $region8
    $region5: #{tpu_custom_call.1} parent=1 // loop_body
      %s22 = ssub.s32 %s17, 1
      %s23 = ssub.s32 %s17, 2
      %s24 = sadd.s32 %s17, 1
      %s25 = ssub.s32 %s17, %s24
      %p26 = scmp.eq.s32.totalorder %s25, 0
      %s28 = sadd.s32 %s27, 1
      %s29 = scalar_select %p26, %s27, %s28
      %p32 = pneg %p26
      %p33 = scmp.eq.s32.totalorder %s17, 1
      %p34 = por %p32, %p33
      %p35 = scmp.ne.s32.totalorder %s27, %s30
      %p36 = scmp.eq.s32.totalorder %s17, 0
      %p37 = por %p35, %p36
      %p38 = scmp.ne.s32.totalorder %s27, %s30
      %p39 = scmp.eq.s32.totalorder %s22, 1
      %p40 = por %p38, %p39
      %p41 = scmp.ne.s32.totalorder %s30, %s31
      %p42 = scmp.eq.s32.totalorder %s22, 0
      %p43 = por %p41, %p42
      %p44 = scmp.ne.s32.totalorder %s30, %s31
      %p45 = scmp.eq.s32.totalorder %s23, 1
      %p46 = por %p44, %p45
      %p48 = scmp.ne.s32.totalorder %s31, %s47
      %p49 = scmp.eq.s32.totalorder %s23, 0
      %p50 = por %p48, %p49
      %s51 = ssub.s32 %s17, %s24
      %p52 = scmp.eq.s32.totalorder %s51, 0
      %s54 = sadd.s32 %s53, 1
      %s55 = scalar_select %p52, %s53, %s54
      %p58 = pneg %p52
      %p59 = scmp.eq.s32.totalorder %s17, 1
      %p60 = por %p58, %p59
      %p61 = scmp.ne.s32.totalorder %s53, %s56
      %p62 = scmp.eq.s32.totalorder %s17, 0
      %p63 = por %p61, %p62
      %p64 = scmp.ne.s32.totalorder %s53, %s56
      %p65 = scmp.eq.s32.totalorder %s22, 1
      %p66 = por %p64, %p65
      %p67 = scmp.ne.s32.totalorder %s56, %s57
      %p68 = scmp.eq.s32.totalorder %s22, 0
      %p69 = por %p67, %p68
      %p70 = scmp.ne.s32.totalorder %s56, %s57
      %p71 = scmp.eq.s32.totalorder %s23, 1
      %p72 = por %p70, %p71
      %p74 = scmp.ne.s32.totalorder %s57, %s73
      %p75 = scmp.eq.s32.totalorder %s23, 0
      %p76 = por %p74, %p75
      %s77 = ssub.s32 %s17, %s24
      %p78 = scmp.eq.s32.totalorder %s77, 0
      %s80 = sadd.s32 %s79, 1
      %s81 = scalar_select %p78, %s79, %s80
      %p84 = pneg %p78
      %p85 = scmp.eq.s32.totalorder %s17, 1
      %p86 = por %p84, %p85
      %p87 = scmp.ne.s32.totalorder %s79, %s82
      %p88 = scmp.eq.s32.totalorder %s17, 0
      %p89 = por %p87, %p88
      %p90 = scmp.ne.s32.totalorder %s79, %s82
      %p91 = scmp.eq.s32.totalorder %s22, 1
      %p92 = por %p90, %p91
      %p93 = scmp.ne.s32.totalorder %s82, %s83
      %p94 = scmp.eq.s32.totalorder %s22, 0
      %p95 = por %p93, %p94
      %p96 = scmp.ne.s32.totalorder %s82, %s83
      %p97 = scmp.eq.s32.totalorder %s23, 1
      %p98 = por %p96, %p97
      %p100 = scmp.ne.s32.totalorder %s83, %s99
      %p101 = scmp.eq.s32.totalorder %s23, 0
      %p102 = por %p100, %p101
      %p103 = scmp.le.s32.totalorder 1, %s17
      %p104 = scmp.lt.s32.totalorder %s17, 3
      %p105 = pnand %p103, %p104
      %p106 = pneg %p105
      // Predicated region
      $region9: #{tpu_custom_call.1} parent=5 // pred_check
        _
      $region10: #{tpu_custom_call.1} parent=5 // pred_check_branch
        %108 = sbr.rel (%p105) target = $region12
      $region11: #{tpu_custom_call.1} parent=5 // pred_region
        %s109 = ssub.s32 %s17, 1
      $region12: #{tpu_custom_call.1} parent=5 // pred_fallthru
        _
      %p110 = scmp.lt.s32.totalorder %s17, 2
      // Predicated region
      $region13: #{tpu_custom_call.1} parent=5 // pred_check
        %p111 = pneg %p110
      $region14: #{tpu_custom_call.1} parent=5 // pred_check_branch
        %113 = sbr.rel (%p111) target = $region16
      $region15: #{tpu_custom_call.1} parent=5 // pred_region
        // Predicated region
        $region17: #{tpu_custom_call.1} parent=15 // pred_check
          %p114 = pneg %p37
        $region18: #{tpu_custom_call.1} parent=15 // pred_check_branch
          %116 = sbr.rel (%p114) target = $region20
        $region19: #{tpu_custom_call.1} parent=15 // pred_region
          %s117 = sand.u32 %s27, 1
          %s118 = scalar_lea.sflag [#allocation3], %s117
          %s119 = sand.u32 %s27, 1
          %s120 = smul.addr %s119, 1024
          %s121 = scalar_lea.vmem [#allocation2], %s120
          %s122 = smul.u32 128, %s17
          %s124 = ssub.s32 16384, 16384
          %125 = vsyncadd %s118, %s124
          %s126 = smul.addr %s122, 128
          %s127 = scalar_lea.hbm %s0, %s126
          %s128 = sshll.u32 %s121, 4
          %s129 = int_to_ptr.vmem [resolvable:$true] %s128
          %134 = dma.hbm_to_vmem [thread:$0]  %s127, 16384, %s129, %s118, 128, 128, 8
        $region20: #{tpu_custom_call.1} parent=15 // pred_fallthru
          _
        // Predicated region
        $region21: #{tpu_custom_call.1} parent=15 // pred_check
          %p135 = pneg %p63
        $region22: #{tpu_custom_call.1} parent=15 // pred_check_branch
          %137 = sbr.rel (%p135) target = $region24
        $region23: #{tpu_custom_call.1} parent=15 // pred_region
          %s138 = sand.u32 %s53, 1
          %s139 = scalar_lea.sflag [#allocation6], %s138
          %s140 = sand.u32 %s53, 1
          %s141 = smul.addr %s140, 1024
          %s142 = scalar_lea.vmem [#allocation5], %s141
          %s143 = smul.u32 128, %s17
          %s145 = ssub.s32 16384, 16384
          %146 = vsyncadd %s139, %s145
          %s147 = smul.addr %s143, 128
          %s148 = scalar_lea.hbm %s1, %s147
          %s149 = sshll.u32 %s142, 4
          %s150 = int_to_ptr.vmem [resolvable:$true] %s149
          %155 = dma.hbm_to_vmem [thread:$0]  %s148, 16384, %s150, %s139, 128, 128, 8
        $region24: #{tpu_custom_call.1} parent=15 // pred_fallthru
          _
      $region16: #{tpu_custom_call.1} parent=5 // pred_fallthru
        _
      %p156 = scmp.le.s32.totalorder 1, %s17
      %p157 = scmp.lt.s32.totalorder %s17, 3
      %p158 = pnand %p156, %p157
      %p159 = pneg %p158
      // Predicated region
      $region25: #{tpu_custom_call.1} parent=5 // pred_check
        _
      $region26: #{tpu_custom_call.1} parent=5 // pred_check_branch
        %161 = sbr.rel (%p158) target = $region28
      $region27: #{tpu_custom_call.1} parent=5 // pred_region
        %s162 = ssub.s32 %s17, 1
        %s163 = sand.u32 %s30, 1
        %s164 = scalar_lea.sflag [#allocation3], %s163
        %s165 = sand.u32 %s30, 1
        %s166 = smul.addr %s165, 1024
        %s167 = scalar_lea.vmem [#allocation2], %s166
        // Predicated region
        $region29: #{tpu_custom_call.1} parent=27 // pred_check
          %p168 = pneg %p43
        $region30: #{tpu_custom_call.1} parent=27 // pred_check_branch
          %170 = sbr.rel (%p168) target = $region32
        $region31: #{tpu_custom_call.1} parent=27 // pred_region
          %171 = dma.done %s164, 16384
        $region32: #{tpu_custom_call.1} parent=27 // pred_fallthru
          _
        %s172 = sand.u32 %s56, 1
        %s173 = scalar_lea.sflag [#allocation6], %s172
        %s174 = sand.u32 %s56, 1
        %s175 = smul.addr %s174, 1024
        %s176 = scalar_lea.vmem [#allocation5], %s175
        // Predicated region
        $region33: #{tpu_custom_call.1} parent=27 // pred_check
          %p177 = pneg %p69
        $region34: #{tpu_custom_call.1} parent=27 // pred_check_branch
          %179 = sbr.rel (%p177) target = $region36
        $region35: #{tpu_custom_call.1} parent=27 // pred_region
          %180 = dma.done %s173, 16384
        $region36: #{tpu_custom_call.1} parent=27 // pred_fallthru
          _
        %s181 = sand.u32 %s30, 1
        %s182 = scalar_lea.sflag [#allocation3], %s181
        %s183 = sand.u32 %s30, 1
        %s184 = smul.addr %s183, 1024
        %s185 = scalar_lea.vmem [#allocation2], %s184
        %p186 = pneg %p43
        %p187 = pneg %p40
        %s188 = sand.u32 %s56, 1
        %s189 = scalar_lea.sflag [#allocation6], %s188
        %s190 = sand.u32 %s56, 1
        %s191 = smul.addr %s190, 1024
        %s192 = scalar_lea.vmem [#allocation5], %s191
        %p193 = pneg %p69
        %p194 = pneg %p66
        %p195 = pneg %p95
        %p196 = pneg %p92
        %s197 = sand.u32 %s82, 1
        %s198 = scalar_lea.sflag [#allocation4], %s197
        %s199 = sand.u32 %s82, 1
        %s200 = smul.addr %s199, 2048
        %s201 = scalar_lea.vmem [#allocation7], %s200
        %s202 = smul.u32 128, %s22
        %s203 = smul.u32 128, %s22
        %s204 = smul.u32 128, %s22
        %v205 = vld [vmem:[%s167] sm:$0xff]
        %v206 = vld [vmem:[%s167 + $0x8] sm:$0xff]
        %v207 = vld [vmem:[%s167 + $0x10] sm:$0xff]
        %v208 = vld [vmem:[%s167 + $0x18] sm:$0xff]
        %v209 = vld [vmem:[%s167 + $0x20] sm:$0xff]
        %v210 = vld [vmem:[%s167 + $0x28] sm:$0xff]
        %v211 = vld [vmem:[%s167 + $0x30] sm:$0xff]
        %v212 = vld [vmem:[%s167 + $0x38] sm:$0xff]
        %v213 = vld [vmem:[%s167 + $0x40] sm:$0xff]
        %v214 = vld [vmem:[%s167 + $0x48] sm:$0xff]
        %v215 = vld [vmem:[%s167 + $0x50] sm:$0xff]
        %v216 = vld [vmem:[%s167 + $0x58] sm:$0xff]
        %v217 = vld [vmem:[%s167 + $0x60] sm:$0xff]
        %v218 = vld [vmem:[%s167 + $0x68] sm:$0xff]
        %v219 = vld [vmem:[%s167 + $0x70] sm:$0xff]
        %v220 = vld [vmem:[%s167 + $0x78] sm:$0xff]
        %v221 = vld [vmem:[%s167 + $0x80] sm:$0xff]
        %v222 = vld [vmem:[%s167 + $0x88] sm:$0xff]
        %v223 = vld [vmem:[%s167 + $0x90] sm:$0xff]
        %v224 = vld [vmem:[%s167 + $0x98] sm:$0xff]
        %v225 = vld [vmem:[%s167 + $0xa0] sm:$0xff]
        %v226 = vld [vmem:[%s167 + $0xa8] sm:$0xff]
        %v227 = vld [vmem:[%s167 + $0xb0] sm:$0xff]
        %v228 = vld [vmem:[%s167 + $0xb8] sm:$0xff]
        %v229 = vld [vmem:[%s167 + $0xc0] sm:$0xff]
        %v230 = vld [vmem:[%s167 + $0xc8] sm:$0xff]
        %v231 = vld [vmem:[%s167 + $0xd0] sm:$0xff]
        %v232 = vld [vmem:[%s167 + $0xd8] sm:$0xff]
        %v233 = vld [vmem:[%s167 + $0xe0] sm:$0xff]
        %v234 = vld [vmem:[%s167 + $0xe8] sm:$0xff]
        %v235 = vld [vmem:[%s167 + $0xf0] sm:$0xff]
        %v236 = vld [vmem:[%s167 + $0xf8] sm:$0xff]
        %v237 = vld [vmem:[%s167 + $0x100] sm:$0xff]
        %v238 = vld [vmem:[%s167 + $0x108] sm:$0xff]
        %v239 = vld [vmem:[%s167 + $0x110] sm:$0xff]
        %v240 = vld [vmem:[%s167 + $0x118] sm:$0xff]
        %v241 = vld [vmem:[%s167 + $0x120] sm:$0xff]
        %v242 = vld [vmem:[%s167 + $0x128] sm:$0xff]
        %v243 = vld [vmem:[%s167 + $0x130] sm:$0xff]
        %v244 = vld [vmem:[%s167 + $0x138] sm:$0xff]
        %v245 = vld [vmem:[%s167 + $0x140] sm:$0xff]
        %v246 = vld [vmem:[%s167 + $0x148] sm:$0xff]
        %v247 = vld [vmem:[%s167 + $0x150] sm:$0xff]
        %v248 = vld [vmem:[%s167 + $0x158] sm:$0xff]
        %v249 = vld [vmem:[%s167 + $0x160] sm:$0xff]
        %v250 = vld [vmem:[%s167 + $0x168] sm:$0xff]
        %v251 = vld [vmem:[%s167 + $0x170] sm:$0xff]
        %v252 = vld [vmem:[%s167 + $0x178] sm:$0xff]
        %v253 = vld [vmem:[%s167 + $0x180] sm:$0xff]
        %v254 = vld [vmem:[%s167 + $0x188] sm:$0xff]
        %v255 = vld [vmem:[%s167 + $0x190] sm:$0xff]
        %v256 = vld [vmem:[%s167 + $0x198] sm:$0xff]
        %v257 = vld [vmem:[%s167 + $0x1a0] sm:$0xff]
        %v258 = vld [vmem:[%s167 + $0x1a8] sm:$0xff]
        %v259 = vld [vmem:[%s167 + $0x1b0] sm:$0xff]
        %v260 = vld [vmem:[%s167 + $0x1b8] sm:$0xff]
        %v261 = vld [vmem:[%s167 + $0x1c0] sm:$0xff]
        %v262 = vld [vmem:[%s167 + $0x1c8] sm:$0xff]
        %v263 = vld [vmem:[%s167 + $0x1d0] sm:$0xff]
        %v264 = vld [vmem:[%s167 + $0x1d8] sm:$0xff]
        %v265 = vld [vmem:[%s167 + $0x1e0] sm:$0xff]
        %v266 = vld [vmem:[%s167 + $0x1e8] sm:$0xff]
        %v267 = vld [vmem:[%s167 + $0x1f0] sm:$0xff]
        %v268 = vld [vmem:[%s167 + $0x1f8] sm:$0xff]
        %v269 = vld [vmem:[%s167 + $0x200] sm:$0xff]
        %v270 = vld [vmem:[%s167 + $0x208] sm:$0xff]
        %v271 = vld [vmem:[%s167 + $0x210] sm:$0xff]
        %v272 = vld [vmem:[%s167 + $0x218] sm:$0xff]
        %v273 = vld [vmem:[%s167 + $0x220] sm:$0xff]
        %v274 = vld [vmem:[%s167 + $0x228] sm:$0xff]
        %v275 = vld [vmem:[%s167 + $0x230] sm:$0xff]
        %v276 = vld [vmem:[%s167 + $0x238] sm:$0xff]
        %v277 = vld [vmem:[%s167 + $0x240] sm:$0xff]
        %v278 = vld [vmem:[%s167 + $0x248] sm:$0xff]
        %v279 = vld [vmem:[%s167 + $0x250] sm:$0xff]
        %v280 = vld [vmem:[%s167 + $0x258] sm:$0xff]
        %v281 = vld [vmem:[%s167 + $0x260] sm:$0xff]
        %v282 = vld [vmem:[%s167 + $0x268] sm:$0xff]
        %v283 = vld [vmem:[%s167 + $0x270] sm:$0xff]
        %v284 = vld [vmem:[%s167 + $0x278] sm:$0xff]
        %v285 = vld [vmem:[%s167 + $0x280] sm:$0xff]
        %v286 = vld [vmem:[%s167 + $0x288] sm:$0xff]
        %v287 = vld [vmem:[%s167 + $0x290] sm:$0xff]
        %v288 = vld [vmem:[%s167 + $0x298] sm:$0xff]
        %v289 = vld [vmem:[%s167 + $0x2a0] sm:$0xff]
        %v290 = vld [vmem:[%s167 + $0x2a8] sm:$0xff]
        %v291 = vld [vmem:[%s167 + $0x2b0] sm:$0xff]
        %v292 = vld [vmem:[%s167 + $0x2b8] sm:$0xff]
        %v293 = vld [vmem:[%s167 + $0x2c0] sm:$0xff]
        %v294 = vld [vmem:[%s167 + $0x2c8] sm:$0xff]
        %v295 = vld [vmem:[%s167 + $0x2d0] sm:$0xff]
        %v296 = vld [vmem:[%s167 + $0x2d8] sm:$0xff]
        %v297 = vld [vmem:[%s167 + $0x2e0] sm:$0xff]
        %v298 = vld [vmem:[%s167 + $0x2e8] sm:$0xff]
        %v299 = vld [vmem:[%s167 + $0x2f0] sm:$0xff]
        %v300 = vld [vmem:[%s167 + $0x2f8] sm:$0xff]
        %v301 = vld [vmem:[%s167 + $0x300] sm:$0xff]
        %v302 = vld [vmem:[%s167 + $0x308] sm:$0xff]
        %v303 = vld [vmem:[%s167 + $0x310] sm:$0xff]
        %v304 = vld [vmem:[%s167 + $0x318] sm:$0xff]
        %v305 = vld [vmem:[%s167 + $0x320] sm:$0xff]
        %v306 = vld [vmem:[%s167 + $0x328] sm:$0xff]
        %v307 = vld [vmem:[%s167 + $0x330] sm:$0xff]
        %v308 = vld [vmem:[%s167 + $0x338] sm:$0xff]
        %v309 = vld [vmem:[%s167 + $0x340] sm:$0xff]
        %v310 = vld [vmem:[%s167 + $0x348] sm:$0xff]
        %v311 = vld [vmem:[%s167 + $0x350] sm:$0xff]
        %v312 = vld [vmem:[%s167 + $0x358] sm:$0xff]
        %v313 = vld [vmem:[%s167 + $0x360] sm:$0xff]
        %v314 = vld [vmem:[%s167 + $0x368] sm:$0xff]
        %v315 = vld [vmem:[%s167 + $0x370] sm:$0xff]
        %v316 = vld [vmem:[%s167 + $0x378] sm:$0xff]
        %v317 = vld [vmem:[%s167 + $0x380] sm:$0xff]
        %v318 = vld [vmem:[%s167 + $0x388] sm:$0xff]
        %v319 = vld [vmem:[%s167 + $0x390] sm:$0xff]
        %v320 = vld [vmem:[%s167 + $0x398] sm:$0xff]
        %v321 = vld [vmem:[%s167 + $0x3a0] sm:$0xff]
        %v322 = vld [vmem:[%s167 + $0x3a8] sm:$0xff]
        %v323 = vld [vmem:[%s167 + $0x3b0] sm:$0xff]
        %v324 = vld [vmem:[%s167 + $0x3b8] sm:$0xff]
        %v325 = vld [vmem:[%s167 + $0x3c0] sm:$0xff]
        %v326 = vld [vmem:[%s167 + $0x3c8] sm:$0xff]
        %v327 = vld [vmem:[%s167 + $0x3d0] sm:$0xff]
        %v328 = vld [vmem:[%s167 + $0x3d8] sm:$0xff]
        %v329 = vld [vmem:[%s167 + $0x3e0] sm:$0xff]
        %v330 = vld [vmem:[%s167 + $0x3e8] sm:$0xff]
        %v331 = vld [vmem:[%s167 + $0x3f0] sm:$0xff]
        %v332 = vld [vmem:[%s167 + $0x3f8] sm:$0xff]
        %333 = vst [vmem:[%s201] sm:$0xff] %v205
        %334 = vst [vmem:[%s201 + $0x10] sm:$0xff] %v206
        %335 = vst [vmem:[%s201 + $0x20] sm:$0xff] %v207
        %336 = vst [vmem:[%s201 + $0x30] sm:$0xff] %v208
        %337 = vst [vmem:[%s201 + $0x40] sm:$0xff] %v209
        %338 = vst [vmem:[%s201 + $0x50] sm:$0xff] %v210
        %339 = vst [vmem:[%s201 + $0x60] sm:$0xff] %v211
        %340 = vst [vmem:[%s201 + $0x70] sm:$0xff] %v212
        %341 = vst [vmem:[%s201 + $0x80] sm:$0xff] %v213
        %342 = vst [vmem:[%s201 + $0x90] sm:$0xff] %v214
        %343 = vst [vmem:[%s201 + $0xa0] sm:$0xff] %v215
        %344 = vst [vmem:[%s201 + $0xb0] sm:$0xff] %v216
        %345 = vst [vmem:[%s201 + $0xc0] sm:$0xff] %v217
        %346 = vst [vmem:[%s201 + $0xd0] sm:$0xff] %v218
        %347 = vst [vmem:[%s201 + $0xe0] sm:$0xff] %v219
        %348 = vst [vmem:[%s201 + $0xf0] sm:$0xff] %v220
        %349 = vst [vmem:[%s201 + $0x100] sm:$0xff] %v221
        %350 = vst [vmem:[%s201 + $0x110] sm:$0xff] %v222
        %351 = vst [vmem:[%s201 + $0x120] sm:$0xff] %v223
        %352 = vst [vmem:[%s201 + $0x130] sm:$0xff] %v224
        %353 = vst [vmem:[%s201 + $0x140] sm:$0xff] %v225
        %354 = vst [vmem:[%s201 + $0x150] sm:$0xff] %v226
        %355 = vst [vmem:[%s201 + $0x160] sm:$0xff] %v227
        %356 = vst [vmem:[%s201 + $0x170] sm:$0xff] %v228
        %357 = vst [vmem:[%s201 + $0x180] sm:$0xff] %v229
        %358 = vst [vmem:[%s201 + $0x190] sm:$0xff] %v230
        %359 = vst [vmem:[%s201 + $0x1a0] sm:$0xff] %v231
        %360 = vst [vmem:[%s201 + $0x1b0] sm:$0xff] %v232
        %361 = vst [vmem:[%s201 + $0x1c0] sm:$0xff] %v233
        %362 = vst [vmem:[%s201 + $0x1d0] sm:$0xff] %v234
        %363 = vst [vmem:[%s201 + $0x1e0] sm:$0xff] %v235
        %364 = vst [vmem:[%s201 + $0x1f0] sm:$0xff] %v236
        %365 = vst [vmem:[%s201 + $0x200] sm:$0xff] %v237
        %366 = vst [vmem:[%s201 + $0x210] sm:$0xff] %v238
        %367 = vst [vmem:[%s201 + $0x220] sm:$0xff] %v239
        %368 = vst [vmem:[%s201 + $0x230] sm:$0xff] %v240
        %369 = vst [vmem:[%s201 + $0x240] sm:$0xff] %v241
        %370 = vst [vmem:[%s201 + $0x250] sm:$0xff] %v242
        %371 = vst [vmem:[%s201 + $0x260] sm:$0xff] %v243
        %372 = vst [vmem:[%s201 + $0x270] sm:$0xff] %v244
        %373 = vst [vmem:[%s201 + $0x280] sm:$0xff] %v245
        %374 = vst [vmem:[%s201 + $0x290] sm:$0xff] %v246
        %375 = vst [vmem:[%s201 + $0x2a0] sm:$0xff] %v247
        %376 = vst [vmem:[%s201 + $0x2b0] sm:$0xff] %v248
        %377 = vst [vmem:[%s201 + $0x2c0] sm:$0xff] %v249
        %378 = vst [vmem:[%s201 + $0x2d0] sm:$0xff] %v250
        %379 = vst [vmem:[%s201 + $0x2e0] sm:$0xff] %v251
        %380 = vst [vmem:[%s201 + $0x2f0] sm:$0xff] %v252
        %381 = vst [vmem:[%s201 + $0x300] sm:$0xff] %v253
        %382 = vst [vmem:[%s201 + $0x310] sm:$0xff] %v254
        %383 = vst [vmem:[%s201 + $0x320] sm:$0xff] %v255
        %384 = vst [vmem:[%s201 + $0x330] sm:$0xff] %v256
        %385 = vst [vmem:[%s201 + $0x340] sm:$0xff] %v257
        %386 = vst [vmem:[%s201 + $0x350] sm:$0xff] %v258
        %387 = vst [vmem:[%s201 + $0x360] sm:$0xff] %v259
        %388 = vst [vmem:[%s201 + $0x370] sm:$0xff] %v260
        %389 = vst [vmem:[%s201 + $0x380] sm:$0xff] %v261
        %390 = vst [vmem:[%s201 + $0x390] sm:$0xff] %v262
        %391 = vst [vmem:[%s201 + $0x3a0] sm:$0xff] %v263
        %392 = vst [vmem:[%s201 + $0x3b0] sm:$0xff] %v264
        %393 = vst [vmem:[%s201 + $0x3c0] sm:$0xff] %v265
        %394 = vst [vmem:[%s201 + $0x3d0] sm:$0xff] %v266
        %395 = vst [vmem:[%s201 + $0x3e0] sm:$0xff] %v267
        %396 = vst [vmem:[%s201 + $0x3f0] sm:$0xff] %v268
        %397 = vst [vmem:[%s201 + $0x400] sm:$0xff] %v269
        %398 = vst [vmem:[%s201 + $0x410] sm:$0xff] %v270
        %399 = vst [vmem:[%s201 + $0x420] sm:$0xff] %v271
        %400 = vst [vmem:[%s201 + $0x430] sm:$0xff] %v272
        %401 = vst [vmem:[%s201 + $0x440] sm:$0xff] %v273
        %402 = vst [vmem:[%s201 + $0x450] sm:$0xff] %v274
        %403 = vst [vmem:[%s201 + $0x460] sm:$0xff] %v275
        %404 = vst [vmem:[%s201 + $0x470] sm:$0xff] %v276
        %405 = vst [vmem:[%s201 + $0x480] sm:$0xff] %v277
        %406 = vst [vmem:[%s201 + $0x490] sm:$0xff] %v278
        %407 = vst [vmem:[%s201 + $0x4a0] sm:$0xff] %v279
        %408 = vst [vmem:[%s201 + $0x4b0] sm:$0xff] %v280
        %409 = vst [vmem:[%s201 + $0x4c0] sm:$0xff] %v281
        %410 = vst [vmem:[%s201 + $0x4d0] sm:$0xff] %v282
        %411 = vst [vmem:[%s201 + $0x4e0] sm:$0xff] %v283
        %412 = vst [vmem:[%s201 + $0x4f0] sm:$0xff] %v284
        %413 = vst [vmem:[%s201 + $0x500] sm:$0xff] %v285
        %414 = vst [vmem:[%s201 + $0x510] sm:$0xff] %v286
        %415 = vst [vmem:[%s201 + $0x520] sm:$0xff] %v287
        %416 = vst [vmem:[%s201 + $0x530] sm:$0xff] %v288
        %417 = vst [vmem:[%s201 + $0x540] sm:$0xff] %v289
        %418 = vst [vmem:[%s201 + $0x550] sm:$0xff] %v290
        %419 = vst [vmem:[%s201 + $0x560] sm:$0xff] %v291
        %420 = vst [vmem:[%s201 + $0x570] sm:$0xff] %v292
        %421 = vst [vmem:[%s201 + $0x580] sm:$0xff] %v293
        %422 = vst [vmem:[%s201 + $0x590] sm:$0xff] %v294
        %423 = vst [vmem:[%s201 + $0x5a0] sm:$0xff] %v295
        %424 = vst [vmem:[%s201 + $0x5b0] sm:$0xff] %v296
        %425 = vst [vmem:[%s201 + $0x5c0] sm:$0xff] %v297
        %426 = vst [vmem:[%s201 + $0x5d0] sm:$0xff] %v298
        %427 = vst [vmem:[%s201 + $0x5e0] sm:$0xff] %v299
        %428 = vst [vmem:[%s201 + $0x5f0] sm:$0xff] %v300
        %429 = vst [vmem:[%s201 + $0x600] sm:$0xff] %v301
        %430 = vst [vmem:[%s201 + $0x610] sm:$0xff] %v302
        %431 = vst [vmem:[%s201 + $0x620] sm:$0xff] %v303
        %432 = vst [vmem:[%s201 + $0x630] sm:$0xff] %v304
        %433 = vst [vmem:[%s201 + $0x640] sm:$0xff] %v305
        %434 = vst [vmem:[%s201 + $0x650] sm:$0xff] %v306
        %435 = vst [vmem:[%s201 + $0x660] sm:$0xff] %v307
        %436 = vst [vmem:[%s201 + $0x670] sm:$0xff] %v308
        %437 = vst [vmem:[%s201 + $0x680] sm:$0xff] %v309
        %438 = vst [vmem:[%s201 + $0x690] sm:$0xff] %v310
        %439 = vst [vmem:[%s201 + $0x6a0] sm:$0xff] %v311
        %440 = vst [vmem:[%s201 + $0x6b0] sm:$0xff] %v312
        %441 = vst [vmem:[%s201 + $0x6c0] sm:$0xff] %v313
        %442 = vst [vmem:[%s201 + $0x6d0] sm:$0xff] %v314
        %443 = vst [vmem:[%s201 + $0x6e0] sm:$0xff] %v315
        %444 = vst [vmem:[%s201 + $0x6f0] sm:$0xff] %v316
        %445 = vst [vmem:[%s201 + $0x700] sm:$0xff] %v317
        %446 = vst [vmem:[%s201 + $0x710] sm:$0xff] %v318
        %447 = vst [vmem:[%s201 + $0x720] sm:$0xff] %v319
        %448 = vst [vmem:[%s201 + $0x730] sm:$0xff] %v320
        %449 = vst [vmem:[%s201 + $0x740] sm:$0xff] %v321
        %450 = vst [vmem:[%s201 + $0x750] sm:$0xff] %v322
        %451 = vst [vmem:[%s201 + $0x760] sm:$0xff] %v323
        %452 = vst [vmem:[%s201 + $0x770] sm:$0xff] %v324
        %453 = vst [vmem:[%s201 + $0x780] sm:$0xff] %v325
        %454 = vst [vmem:[%s201 + $0x790] sm:$0xff] %v326
        %455 = vst [vmem:[%s201 + $0x7a0] sm:$0xff] %v327
        %456 = vst [vmem:[%s201 + $0x7b0] sm:$0xff] %v328
        %457 = vst [vmem:[%s201 + $0x7c0] sm:$0xff] %v329
        %458 = vst [vmem:[%s201 + $0x7d0] sm:$0xff] %v330
        %459 = vst [vmem:[%s201 + $0x7e0] sm:$0xff] %v331
        %460 = vst [vmem:[%s201 + $0x7f0] sm:$0xff] %v332
        %v461 = vld [vmem:[%s176] sm:$0xff]
        %v462 = vld [vmem:[%s176 + $0x8] sm:$0xff]
        %v463 = vld [vmem:[%s176 + $0x10] sm:$0xff]
        %v464 = vld [vmem:[%s176 + $0x18] sm:$0xff]
        %v465 = vld [vmem:[%s176 + $0x20] sm:$0xff]
        %v466 = vld [vmem:[%s176 + $0x28] sm:$0xff]
        %v467 = vld [vmem:[%s176 + $0x30] sm:$0xff]
        %v468 = vld [vmem:[%s176 + $0x38] sm:$0xff]
        %v469 = vld [vmem:[%s176 + $0x40] sm:$0xff]
        %v470 = vld [vmem:[%s176 + $0x48] sm:$0xff]
        %v471 = vld [vmem:[%s176 + $0x50] sm:$0xff]
        %v472 = vld [vmem:[%s176 + $0x58] sm:$0xff]
        %v473 = vld [vmem:[%s176 + $0x60] sm:$0xff]
        %v474 = vld [vmem:[%s176 + $0x68] sm:$0xff]
        %v475 = vld [vmem:[%s176 + $0x70] sm:$0xff]
        %v476 = vld [vmem:[%s176 + $0x78] sm:$0xff]
        %v477 = vld [vmem:[%s176 + $0x80] sm:$0xff]
        %v478 = vld [vmem:[%s176 + $0x88] sm:$0xff]
        %v479 = vld [vmem:[%s176 + $0x90] sm:$0xff]
        %v480 = vld [vmem:[%s176 + $0x98] sm:$0xff]
        %v481 = vld [vmem:[%s176 + $0xa0] sm:$0xff]
        %v482 = vld [vmem:[%s176 + $0xa8] sm:$0xff]
        %v483 = vld [vmem:[%s176 + $0xb0] sm:$0xff]
        %v484 = vld [vmem:[%s176 + $0xb8] sm:$0xff]
        %v485 = vld [vmem:[%s176 + $0xc0] sm:$0xff]
        %v486 = vld [vmem:[%s176 + $0xc8] sm:$0xff]
        %v487 = vld [vmem:[%s176 + $0xd0] sm:$0xff]
        %v488 = vld [vmem:[%s176 + $0xd8] sm:$0xff]
        %v489 = vld [vmem:[%s176 + $0xe0] sm:$0xff]
        %v490 = vld [vmem:[%s176 + $0xe8] sm:$0xff]
        %v491 = vld [vmem:[%s176 + $0xf0] sm:$0xff]
        %v492 = vld [vmem:[%s176 + $0xf8] sm:$0xff]
        %v493 = vld [vmem:[%s176 + $0x100] sm:$0xff]
        %v494 = vld [vmem:[%s176 + $0x108] sm:$0xff]
        %v495 = vld [vmem:[%s176 + $0x110] sm:$0xff]
        %v496 = vld [vmem:[%s176 + $0x118] sm:$0xff]
        %v497 = vld [vmem:[%s176 + $0x120] sm:$0xff]
        %v498 = vld [vmem:[%s176 + $0x128] sm:$0xff]
        %v499 = vld [vmem:[%s176 + $0x130] sm:$0xff]
        %v500 = vld [vmem:[%s176 + $0x138] sm:$0xff]
        %v501 = vld [vmem:[%s176 + $0x140] sm:$0xff]
        %v502 = vld [vmem:[%s176 + $0x148] sm:$0xff]
        %v503 = vld [vmem:[%s176 + $0x150] sm:$0xff]
        %v504 = vld [vmem:[%s176 + $0x158] sm:$0xff]
        %v505 = vld [vmem:[%s176 + $0x160] sm:$0xff]
        %v506 = vld [vmem:[%s176 + $0x168] sm:$0xff]
        %v507 = vld [vmem:[%s176 + $0x170] sm:$0xff]
        %v508 = vld [vmem:[%s176 + $0x178] sm:$0xff]
        %v509 = vld [vmem:[%s176 + $0x180] sm:$0xff]
        %v510 = vld [vmem:[%s176 + $0x188] sm:$0xff]
        %v511 = vld [vmem:[%s176 + $0x190] sm:$0xff]
        %v512 = vld [vmem:[%s176 + $0x198] sm:$0xff]
        %v513 = vld [vmem:[%s176 + $0x1a0] sm:$0xff]
        %v514 = vld [vmem:[%s176 + $0x1a8] sm:$0xff]
        %v515 = vld [vmem:[%s176 + $0x1b0] sm:$0xff]
        %v516 = vld [vmem:[%s176 + $0x1b8] sm:$0xff]
        %v517 = vld [vmem:[%s176 + $0x1c0] sm:$0xff]
        %v518 = vld [vmem:[%s176 + $0x1c8] sm:$0xff]
        %v519 = vld [vmem:[%s176 + $0x1d0] sm:$0xff]
        %v520 = vld [vmem:[%s176 + $0x1d8] sm:$0xff]
        %v521 = vld [vmem:[%s176 + $0x1e0] sm:$0xff]
        %v522 = vld [vmem:[%s176 + $0x1e8] sm:$0xff]
        %v523 = vld [vmem:[%s176 + $0x1f0] sm:$0xff]
        %v524 = vld [vmem:[%s176 + $0x1f8] sm:$0xff]
        %v525 = vld [vmem:[%s176 + $0x200] sm:$0xff]
        %v526 = vld [vmem:[%s176 + $0x208] sm:$0xff]
        %v527 = vld [vmem:[%s176 + $0x210] sm:$0xff]
        %v528 = vld [vmem:[%s176 + $0x218] sm:$0xff]
        %v529 = vld [vmem:[%s176 + $0x220] sm:$0xff]
        %v530 = vld [vmem:[%s176 + $0x228] sm:$0xff]
        %v531 = vld [vmem:[%s176 + $0x230] sm:$0xff]
        %v532 = vld [vmem:[%s176 + $0x238] sm:$0xff]
        %v533 = vld [vmem:[%s176 + $0x240] sm:$0xff]
        %v534 = vld [vmem:[%s176 + $0x248] sm:$0xff]
        %v535 = vld [vmem:[%s176 + $0x250] sm:$0xff]
        %v536 = vld [vmem:[%s176 + $0x258] sm:$0xff]
        %v537 = vld [vmem:[%s176 + $0x260] sm:$0xff]
        %v538 = vld [vmem:[%s176 + $0x268] sm:$0xff]
        %v539 = vld [vmem:[%s176 + $0x270] sm:$0xff]
        %v540 = vld [vmem:[%s176 + $0x278] sm:$0xff]
        %v541 = vld [vmem:[%s176 + $0x280] sm:$0xff]
        %v542 = vld [vmem:[%s176 + $0x288] sm:$0xff]
        %v543 = vld [vmem:[%s176 + $0x290] sm:$0xff]
        %v544 = vld [vmem:[%s176 + $0x298] sm:$0xff]
        %v545 = vld [vmem:[%s176 + $0x2a0] sm:$0xff]
        %v546 = vld [vmem:[%s176 + $0x2a8] sm:$0xff]
        %v547 = vld [vmem:[%s176 + $0x2b0] sm:$0xff]
        %v548 = vld [vmem:[%s176 + $0x2b8] sm:$0xff]
        %v549 = vld [vmem:[%s176 + $0x2c0] sm:$0xff]
        %v550 = vld [vmem:[%s176 + $0x2c8] sm:$0xff]
        %v551 = vld [vmem:[%s176 + $0x2d0] sm:$0xff]
        %v552 = vld [vmem:[%s176 + $0x2d8] sm:$0xff]
        %v553 = vld [vmem:[%s176 + $0x2e0] sm:$0xff]
        %v554 = vld [vmem:[%s176 + $0x2e8] sm:$0xff]
        %v555 = vld [vmem:[%s176 + $0x2f0] sm:$0xff]
        %v556 = vld [vmem:[%s176 + $0x2f8] sm:$0xff]
        %v557 = vld [vmem:[%s176 + $0x300] sm:$0xff]
        %v558 = vld [vmem:[%s176 + $0x308] sm:$0xff]
        %v559 = vld [vmem:[%s176 + $0x310] sm:$0xff]
        %v560 = vld [vmem:[%s176 + $0x318] sm:$0xff]
        %v561 = vld [vmem:[%s176 + $0x320] sm:$0xff]
        %v562 = vld [vmem:[%s176 + $0x328] sm:$0xff]
        %v563 = vld [vmem:[%s176 + $0x330] sm:$0xff]
        %v564 = vld [vmem:[%s176 + $0x338] sm:$0xff]
        %v565 = vld [vmem:[%s176 + $0x340] sm:$0xff]
        %v566 = vld [vmem:[%s176 + $0x348] sm:$0xff]
        %v567 = vld [vmem:[%s176 + $0x350] sm:$0xff]
        %v568 = vld [vmem:[%s176 + $0x358] sm:$0xff]
        %v569 = vld [vmem:[%s176 + $0x360] sm:$0xff]
        %v570 = vld [vmem:[%s176 + $0x368] sm:$0xff]
        %v571 = vld [vmem:[%s176 + $0x370] sm:$0xff]
        %v572 = vld [vmem:[%s176 + $0x378] sm:$0xff]
        %v573 = vld [vmem:[%s176 + $0x380] sm:$0xff]
        %v574 = vld [vmem:[%s176 + $0x388] sm:$0xff]
        %v575 = vld [vmem:[%s176 + $0x390] sm:$0xff]
        %v576 = vld [vmem:[%s176 + $0x398] sm:$0xff]
        %v577 = vld [vmem:[%s176 + $0x3a0] sm:$0xff]
        %v578 = vld [vmem:[%s176 + $0x3a8] sm:$0xff]
        %v579 = vld [vmem:[%s176 + $0x3b0] sm:$0xff]
        %v580 = vld [vmem:[%s176 + $0x3b8] sm:$0xff]
        %v581 = vld [vmem:[%s176 + $0x3c0] sm:$0xff]
        %v582 = vld [vmem:[%s176 + $0x3c8] sm:$0xff]
        %v583 = vld [vmem:[%s176 + $0x3d0] sm:$0xff]
        %v584 = vld [vmem:[%s176 + $0x3d8] sm:$0xff]
        %v585 = vld [vmem:[%s176 + $0x3e0] sm:$0xff]
        %v586 = vld [vmem:[%s176 + $0x3e8] sm:$0xff]
        %v587 = vld [vmem:[%s176 + $0x3f0] sm:$0xff]
        %v588 = vld [vmem:[%s176 + $0x3f8] sm:$0xff]
        %589 = vst [vmem:[%s201 + $0x8] sm:$0xff] %v461
        %590 = vst [vmem:[%s201 + $0x18] sm:$0xff] %v462
        %591 = vst [vmem:[%s201 + $0x28] sm:$0xff] %v463
        %592 = vst [vmem:[%s201 + $0x38] sm:$0xff] %v464
        %593 = vst [vmem:[%s201 + $0x48] sm:$0xff] %v465
        %594 = vst [vmem:[%s201 + $0x58] sm:$0xff] %v466
        %595 = vst [vmem:[%s201 + $0x68] sm:$0xff] %v467
        %596 = vst [vmem:[%s201 + $0x78] sm:$0xff] %v468
        %597 = vst [vmem:[%s201 + $0x88] sm:$0xff] %v469
        %598 = vst [vmem:[%s201 + $0x98] sm:$0xff] %v470
        %599 = vst [vmem:[%s201 + $0xa8] sm:$0xff] %v471
        %600 = vst [vmem:[%s201 + $0xb8] sm:$0xff] %v472
        %601 = vst [vmem:[%s201 + $0xc8] sm:$0xff] %v473
        %602 = vst [vmem:[%s201 + $0xd8] sm:$0xff] %v474
        %603 = vst [vmem:[%s201 + $0xe8] sm:$0xff] %v475
        %604 = vst [vmem:[%s201 + $0xf8] sm:$0xff] %v476
        %605 = vst [vmem:[%s201 + $0x108] sm:$0xff] %v477
        %606 = vst [vmem:[%s201 + $0x118] sm:$0xff] %v478
        %607 = vst [vmem:[%s201 + $0x128] sm:$0xff] %v479
        %608 = vst [vmem:[%s201 + $0x138] sm:$0xff] %v480
        %609 = vst [vmem:[%s201 + $0x148] sm:$0xff] %v481
        %610 = vst [vmem:[%s201 + $0x158] sm:$0xff] %v482
        %611 = vst [vmem:[%s201 + $0x168] sm:$0xff] %v483
        %612 = vst [vmem:[%s201 + $0x178] sm:$0xff] %v484
        %613 = vst [vmem:[%s201 + $0x188] sm:$0xff] %v485
        %614 = vst [vmem:[%s201 + $0x198] sm:$0xff] %v486
        %615 = vst [vmem:[%s201 + $0x1a8] sm:$0xff] %v487
        %616 = vst [vmem:[%s201 + $0x1b8] sm:$0xff] %v488
        %617 = vst [vmem:[%s201 + $0x1c8] sm:$0xff] %v489
        %618 = vst [vmem:[%s201 + $0x1d8] sm:$0xff] %v490
        %619 = vst [vmem:[%s201 + $0x1e8] sm:$0xff] %v491
        %620 = vst [vmem:[%s201 + $0x1f8] sm:$0xff] %v492
        %621 = vst [vmem:[%s201 + $0x208] sm:$0xff] %v493
        %622 = vst [vmem:[%s201 + $0x218] sm:$0xff] %v494
        %623 = vst [vmem:[%s201 + $0x228] sm:$0xff] %v495
        %624 = vst [vmem:[%s201 + $0x238] sm:$0xff] %v496
        %625 = vst [vmem:[%s201 + $0x248] sm:$0xff] %v497
        %626 = vst [vmem:[%s201 + $0x258] sm:$0xff] %v498
        %627 = vst [vmem:[%s201 + $0x268] sm:$0xff] %v499
        %628 = vst [vmem:[%s201 + $0x278] sm:$0xff] %v500
        %629 = vst [vmem:[%s201 + $0x288] sm:$0xff] %v501
        %630 = vst [vmem:[%s201 + $0x298] sm:$0xff] %v502
        %631 = vst [vmem:[%s201 + $0x2a8] sm:$0xff] %v503
        %632 = vst [vmem:[%s201 + $0x2b8] sm:$0xff] %v504
        %633 = vst [vmem:[%s201 + $0x2c8] sm:$0xff] %v505
        %634 = vst [vmem:[%s201 + $0x2d8] sm:$0xff] %v506
        %635 = vst [vmem:[%s201 + $0x2e8] sm:$0xff] %v507
        %636 = vst [vmem:[%s201 + $0x2f8] sm:$0xff] %v508
        %637 = vst [vmem:[%s201 + $0x308] sm:$0xff] %v509
        %638 = vst [vmem:[%s201 + $0x318] sm:$0xff] %v510
        %639 = vst [vmem:[%s201 + $0x328] sm:$0xff] %v511
        %640 = vst [vmem:[%s201 + $0x338] sm:$0xff] %v512
        %641 = vst [vmem:[%s201 + $0x348] sm:$0xff] %v513
        %642 = vst [vmem:[%s201 + $0x358] sm:$0xff] %v514
        %643 = vst [vmem:[%s201 + $0x368] sm:$0xff] %v515
        %644 = vst [vmem:[%s201 + $0x378] sm:$0xff] %v516
        %645 = vst [vmem:[%s201 + $0x388] sm:$0xff] %v517
        %646 = vst [vmem:[%s201 + $0x398] sm:$0xff] %v518
        %647 = vst [vmem:[%s201 + $0x3a8] sm:$0xff] %v519
        %648 = vst [vmem:[%s201 + $0x3b8] sm:$0xff] %v520
        %649 = vst [vmem:[%s201 + $0x3c8] sm:$0xff] %v521
        %650 = vst [vmem:[%s201 + $0x3d8] sm:$0xff] %v522
        %651 = vst [vmem:[%s201 + $0x3e8] sm:$0xff] %v523
        %652 = vst [vmem:[%s201 + $0x3f8] sm:$0xff] %v524
        %653 = vst [vmem:[%s201 + $0x408] sm:$0xff] %v525
        %654 = vst [vmem:[%s201 + $0x418] sm:$0xff] %v526
        %655 = vst [vmem:[%s201 + $0x428] sm:$0xff] %v527
        %656 = vst [vmem:[%s201 + $0x438] sm:$0xff] %v528
        %657 = vst [vmem:[%s201 + $0x448] sm:$0xff] %v529
        %658 = vst [vmem:[%s201 + $0x458] sm:$0xff] %v530
        %659 = vst [vmem:[%s201 + $0x468] sm:$0xff] %v531
        %660 = vst [vmem:[%s201 + $0x478] sm:$0xff] %v532
        %661 = vst [vmem:[%s201 + $0x488] sm:$0xff] %v533
        %662 = vst [vmem:[%s201 + $0x498] sm:$0xff] %v534
        %663 = vst [vmem:[%s201 + $0x4a8] sm:$0xff] %v535
        %664 = vst [vmem:[%s201 + $0x4b8] sm:$0xff] %v536
        %665 = vst [vmem:[%s201 + $0x4c8] sm:$0xff] %v537
        %666 = vst [vmem:[%s201 + $0x4d8] sm:$0xff] %v538
        %667 = vst [vmem:[%s201 + $0x4e8] sm:$0xff] %v539
        %668 = vst [vmem:[%s201 + $0x4f8] sm:$0xff] %v540
        %669 = vst [vmem:[%s201 + $0x508] sm:$0xff] %v541
        %670 = vst [vmem:[%s201 + $0x518] sm:$0xff] %v542
        %671 = vst [vmem:[%s201 + $0x528] sm:$0xff] %v543
        %672 = vst [vmem:[%s201 + $0x538] sm:$0xff] %v544
        %673 = vst [vmem:[%s201 + $0x548] sm:$0xff] %v545
        %674 = vst [vmem:[%s201 + $0x558] sm:$0xff] %v546
        %675 = vst [vmem:[%s201 + $0x568] sm:$0xff] %v547
        %676 = vst [vmem:[%s201 + $0x578] sm:$0xff] %v548
        %677 = vst [vmem:[%s201 + $0x588] sm:$0xff] %v549
        %678 = vst [vmem:[%s201 + $0x598] sm:$0xff] %v550
        %679 = vst [vmem:[%s201 + $0x5a8] sm:$0xff] %v551
        %680 = vst [vmem:[%s201 + $0x5b8] sm:$0xff] %v552
        %681 = vst [vmem:[%s201 + $0x5c8] sm:$0xff] %v553
        %682 = vst [vmem:[%s201 + $0x5d8] sm:$0xff] %v554
        %683 = vst [vmem:[%s201 + $0x5e8] sm:$0xff] %v555
        %684 = vst [vmem:[%s201 + $0x5f8] sm:$0xff] %v556
        %685 = vst [vmem:[%s201 + $0x608] sm:$0xff] %v557
        %686 = vst [vmem:[%s201 + $0x618] sm:$0xff] %v558
        %687 = vst [vmem:[%s201 + $0x628] sm:$0xff] %v559
        %688 = vst [vmem:[%s201 + $0x638] sm:$0xff] %v560
        %689 = vst [vmem:[%s201 + $0x648] sm:$0xff] %v561
        %690 = vst [vmem:[%s201 + $0x658] sm:$0xff] %v562
        %691 = vst [vmem:[%s201 + $0x668] sm:$0xff] %v563
        %692 = vst [vmem:[%s201 + $0x678] sm:$0xff] %v564
        %693 = vst [vmem:[%s201 + $0x688] sm:$0xff] %v565
        %694 = vst [vmem:[%s201 + $0x698] sm:$0xff] %v566
        %695 = vst [vmem:[%s201 + $0x6a8] sm:$0xff] %v567
        %696 = vst [vmem:[%s201 + $0x6b8] sm:$0xff] %v568
        %697 = vst [vmem:[%s201 + $0x6c8] sm:$0xff] %v569
        %698 = vst [vmem:[%s201 + $0x6d8] sm:$0xff] %v570
        %699 = vst [vmem:[%s201 + $0x6e8] sm:$0xff] %v571
        %700 = vst [vmem:[%s201 + $0x6f8] sm:$0xff] %v572
        %701 = vst [vmem:[%s201 + $0x708] sm:$0xff] %v573
        %702 = vst [vmem:[%s201 + $0x718] sm:$0xff] %v574
        %703 = vst [vmem:[%s201 + $0x728] sm:$0xff] %v575
        %704 = vst [vmem:[%s201 + $0x738] sm:$0xff] %v576
        %705 = vst [vmem:[%s201 + $0x748] sm:$0xff] %v577
        %706 = vst [vmem:[%s201 + $0x758] sm:$0xff] %v578
        %707 = vst [vmem:[%s201 + $0x768] sm:$0xff] %v579
        %708 = vst [vmem:[%s201 + $0x778] sm:$0xff] %v580
        %709 = vst [vmem:[%s201 + $0x788] sm:$0xff] %v581
        %710 = vst [vmem:[%s201 + $0x798] sm:$0xff] %v582
        %711 = vst [vmem:[%s201 + $0x7a8] sm:$0xff] %v583
        %712 = vst [vmem:[%s201 + $0x7b8] sm:$0xff] %v584
        %713 = vst [vmem:[%s201 + $0x7c8] sm:$0xff] %v585
        %714 = vst [vmem:[%s201 + $0x7d8] sm:$0xff] %v586
        %715 = vst [vmem:[%s201 + $0x7e8] sm:$0xff] %v587
        %716 = vst [vmem:[%s201 + $0x7f8] sm:$0xff] %v588
        %s717 = sand.u32 %s82, 1
        %s718 = scalar_lea.sflag [#allocation4], %s717
        %s719 = sand.u32 %s82, 1
        %s720 = smul.addr %s719, 2048
        %s721 = scalar_lea.vmem [#allocation7], %s720
        // Predicated region
        $region37: #{tpu_custom_call.1} parent=27 // pred_check
          %p722 = pneg %p92
        $region38: #{tpu_custom_call.1} parent=27 // pred_check_branch
          %724 = sbr.rel (%p722) target = $region40
        $region39: #{tpu_custom_call.1} parent=27 // pred_region
          %s725 = smul.u32 128, %s22
          %s727 = ssub.s32 32768, 32768
          %728 = vsyncadd %s718, %s727
          %s729 = smul.addr %s725, 2
          %s730 = smul.addr %s729, 128
          %s731 = scalar_lea.hbm %s2, %s730
          %s732 = sshll.u32 %s721, 4
          %s733 = int_to_ptr.vmem [resolvable:$true] %s732
          %738 = dma.vmem_to_hbm [thread:$0]  %s733, 32768, %s731, %s718, 256, 256, 16
        $region40: #{tpu_custom_call.1} parent=27 // pred_fallthru
          _
      $region28: #{tpu_custom_call.1} parent=5 // pred_fallthru
        _
      %p739 = scmp.le.s32.totalorder 2, %s17
      // Predicated region
      $region41: #{tpu_custom_call.1} parent=5 // pred_check
        %p740 = pneg %p739
      $region42: #{tpu_custom_call.1} parent=5 // pred_check_branch
        %742 = sbr.rel (%p740) target = $region44
      $region43: #{tpu_custom_call.1} parent=5 // pred_region
        %s743 = ssub.s32 %s17, 2
        // Predicated region
        $region45: #{tpu_custom_call.1} parent=43 // pred_check
          %p744 = pneg %p98
        $region46: #{tpu_custom_call.1} parent=43 // pred_check_branch
          %746 = sbr.rel (%p744) target = $region48
        $region47: #{tpu_custom_call.1} parent=43 // pred_region
          %s747 = sand.u32 %s83, 1
          %s748 = scalar_lea.sflag [#allocation4], %s747
          %s749 = sand.u32 %s83, 1
          %s750 = smul.addr %s749, 2048
          %s751 = scalar_lea.vmem [#allocation7], %s750
          %752 = dma.done %s748, 32768
        $region48: #{tpu_custom_call.1} parent=43 // pred_fallthru
          _
      $region44: #{tpu_custom_call.1} parent=5 // pred_fallthru
        _
    $region6: #{tpu_custom_call.1} parent=1 // loop_footer
      %s21 = sadd.s32 1, %s17
    $region7: #{tpu_custom_call.1} parent=1 // loop_footer_branch
      %16 = sbr.rel target = $region3
    $region8: #{tpu_custom_call.1} parent=1 // loop_exit
      _
    %753 = vsyncpa [#allocation3], 1
    %s754 = scalar_lea.sflag [#allocation3], 1
    %755 = vsyncpa %s754, 1
    %756 = vsyncpa [#allocation6], 1
    %s757 = scalar_lea.sflag [#allocation6], 1
    %758 = vsyncpa %s757, 1
    %759 = vsyncpa [#allocation4], 1
    %s760 = scalar_lea.sflag [#allocation4], 1
    %761 = vsyncpa %s760, 1

</llo_original>
